<compile_context>
chip_gen: v6e
topology: v6e:2x2x1
jax: 0.10.0
libtpu: 0.0.40
codegen_flags: <defaults>
</compile_context>

<pallas_src>
import functools

import jax
import jax.numpy as jnp
import numpy as np
from jax.experimental import pallas as pl
from jax.experimental.pallas import tpu as pltpu


# ----------------------------------------------------------------------------
# Pallas kernel: all gated blocks + dilated conv (stride-1) + skip conv, NCL
# ----------------------------------------------------------------------------
def _blocks_kernel(x_ref,
                   fused_w_ref, fused_b_ref,
                   out_w_ref, out_b_ref,
                   dil_w0_ref, dil_w1_ref, dil_b_ref,
                   skip_w_ref, skip_b_ref,
                   dil_ref, skip_ref):
    # x_ref:       (bb, Cin, L)          NCL activations (batch tile), f32
    # fused_w_ref: (blocks, K*2Ci, Cin)  sig+gate weights, rows grouped per tap
    #                                    [tap0: sig|gate][tap1: sig|gate]...
    # fused_b_ref: (blocks, 2Ci, 1)
    # out_w_ref:   (blocks, Cin, Ci)     1x1 conv back to residual channels
    # out_b_ref:   (blocks, Cin, 1)
    # dil_w0/1:    (Cin, Cin)            kernel-2 conv taps (pad tap / current tap)
    # dil_b_ref:   (Cin, 1)
    # skip_w_ref:  (Cout, Cin)           1x1 conv on the last timestep
    # skip_b_ref:  (Cout, 1)
    x = x_ref[...]
    bb, cin, L = x.shape
    n_blocks, _, ci = out_w_ref.shape
    two_ci = 2 * ci
    K = fused_w_ref.shape[1] // two_ci
    mm_dtype = fused_w_ref.dtype        # bf16 operands, f32 accumulation

    def causal_shift(v, s):
        # out[..., t] = v[..., t - s], zero for t < s.  Lane roll on the XLU
        # slot + one vsel; no zero-concat copies on the vld/vst path.
        if s == 0:
            return v
        rolled = pltpu.roll(v, shift=s, axis=2)
        t = jax.lax.broadcasted_iota(jnp.int32, v.shape, 2)
        return jnp.where(t >= s, rolled, 0.0)

    def bmm(w, act):
        # (O, I) x (bb, I, L) -> (bb, O, L); bf16 operands, f32 MXU accum.
        wb = jnp.broadcast_to(w, (bb,) + tuple(w.shape))
        return jax.lax.dot_general(
            wb, act.astype(mm_dtype),
            dimension_numbers=(((2,), (1,)), ((0,), (0,))),
            preferred_element_type=jnp.float32)

    gated = x
    for blk in range(n_blocks):
        # One fused MXU matmul per block: sig+gate over all K taps; taps are
        # combined afterwards with cheap causal lane shifts, bias added once.
        y = bmm(fused_w_ref[blk], gated)                 # (bb, K*2Ci, L)
        sg = y[:, (K - 1) * two_ci:K * two_ci, :]        # tap K-1: shift 0
        for k in range(K - 1):
            sg = sg + causal_shift(y[:, k * two_ci:(k + 1) * two_ci, :],
                                   K - 1 - k)
        sg = sg + fused_b_ref[blk]                       # (2Ci,1) lane broadcast
        act = jnp.maximum(sg[:, :ci, :], 0.0) * jax.nn.sigmoid(sg[:, ci:, :])
        gated = gated + bmm(out_w_ref[blk], act) + out_b_ref[blk]

    # "Dilated" conv (kernel 2, left pad 1) at stride 1, lane-dense NCL output;
    # the wrapper keeps every 2nd position (== stride 2).
    dil = (causal_shift(bmm(dil_w0_ref[...], gated), 1)
           + bmm(dil_w1_ref[...], gated)
           + dil_b_ref[...])
    dil_ref[...] = dil.astype(dil_ref.dtype)

    # Skip: 1x1 conv on the last timestep only.
    last = gated[:, :, L - 1:L]                          # (bb, Cin, 1)
    skip = bmm(skip_w_ref[...], last) + skip_b_ref[...]
    skip_ref[...] = skip.astype(skip_ref.dtype)


# ----------------------------------------------------------------------------
# One-time weight re-layout (torch Conv1d (O, I, K) -> matmul-ready, fused)
# ----------------------------------------------------------------------------
def prepare_params(params, matmul_dtype=jnp.bfloat16):
    """Re-layout (and down-cast) weights once, outside the per-call hot path."""
    blocks, ci, cin, K = params["sig_w"].shape

    # (blk, Ci, Cin, K) sig+gate stacked on the out-channel axis -> (blk,2Ci,Cin,K)
    sg = jnp.concatenate([params["sig_w"], params["gate_w"]], axis=1)
    # rows grouped per tap: (blk, K, 2Ci, Cin) -> (blk, K*2Ci, Cin)
    fused_w = jnp.transpose(sg, (0, 3, 1, 2)).reshape(blocks, K * 2 * ci, cin)
    fused_b = jnp.concatenate([params["sig_b"], params["gate_b"]],
                              axis=-1)[..., None]                 # (blk, 2Ci, 1)

    out_w = params["out_w"][..., 0]                               # (blk, Cin, Ci)
    out_b = params["out_b"][..., None]                            # (blk, Cin, 1)

    dil_w0 = params["dil_w"][:, :, 0]                             # (Cin, Cin)
    dil_w1 = params["dil_w"][:, :, 1]                             # (Cin, Cin)
    dil_b = params["dil_b"][:, None]                              # (Cin, 1)

    skip_w = params["skip_w"][..., 0]                             # (Cout, Cin)
    skip_b = params["skip_b"][:, None]                            # (Cout, 1)

    f32 = jnp.float32
    return dict(
        fused_w=fused_w.astype(matmul_dtype), fused_b=fused_b.astype(f32),
        out_w=out_w.astype(matmul_dtype), out_b=out_b.astype(f32),
        dil_w0=dil_w0.astype(matmul_dtype), dil_w1=dil_w1.astype(matmul_dtype),
        dil_b=dil_b.astype(f32),
        skip_w=skip_w.astype(matmul_dtype), skip_b=skip_b.astype(f32))


# ----------------------------------------------------------------------------
# VMEM-budget-driven batch tile size (padding-aware)
# ----------------------------------------------------------------------------
def _round_up(v, m):
    return -(-v // m) * m


def _num_tensorcores_per_chip():
    # Best effort: only v7x has 2 TensorCores per chip; default to 1.
    try:
        info = pltpu.get_tpu_info()
        for name in ("num_cores", "core_count", "num_tensorcores"):
            v = getattr(info, name, None)
            if isinstance(v, int) and v > 0:
                return v
    except Exception:
        pass
    return 1


def _pick_block_b(B, L, cin, ci, K, vmem_budget_bytes=20 << 20):
    # Padded f32 bytes per batch row (channels pad to 8 sublanes, L to 128 lanes).
    lp = _round_up(L, 128)
    rows = lambda c: _round_up(max(int(c), 1), 8)
    per_row = 4 * lp * (
        2 * rows(cin)         # pipelined x tile (double buffered)
        + rows(cin)           # gated carrier
        + rows(K * 2 * ci)    # fused sig/gate matmul output
        + rows(2 * ci)        # combined sg
        + rows(ci)            # gated activation
        + rows(cin)           # residual
        + 2 * rows(cin)       # dilated taps
        + 2 * rows(cin)       # dilated output tile (double buffered)
    )
    per_row = int(per_row * 1.5)          # slack for bf16 casts / temporaries
    bb = max(1, min(B, vmem_budget_bytes // max(per_row, 1)))
    # Only force >=2 grid steps on 2-TensorCore chips (v7x); on v5e/v6e larger
    # tiles amortize the ~600-cycle per-step pipeline overhead.
    if _num_tensorcores_per_chip() >= 2 and B > 1:
        bb = min(bb, pl.cdiv(B, 2))
    # Prefer a divisor of B (avoids computing on undefined rows of a padded
    # last tile); batch rows are independent so this is robustness, not math.
    if bb > 1 and B % bb != 0:
        for cand in range(bb, max(1, bb // 2) - 1, -1):
            if B % cand == 0:
                bb = cand
                break
    return int(bb)


# ----------------------------------------------------------------------------
# Wrapper: batch-tiled grid, pallas_call (no layout transposes needed)
# ----------------------------------------------------------------------------
@functools.partial(jax.jit, static_argnames=("block_b",))
def blocks_forward(x_ncl, prepped, block_b=None):
    B, cin, L = x_ncl.shape
    blocks, k2ci, _ = prepped["fused_w"].shape
    ci = prepped["out_w"].shape[2]
    cout = prepped["skip_w"].shape[0]
    K = k2ci // (2 * ci)

    x = x_ncl.astype(jnp.float32)        # stays NCL: channels->sublanes, L->lanes

    bb = block_b if block_b is not None else _pick_block_b(B, L, cin, ci, K)
    grid = (pl.cdiv(B, bb),)

    dil_full, skip = pl.pallas_call(
        _blocks_kernel,
        out_shape=(jax.ShapeDtypeStruct((B, cin, L), jnp.float32),
                   jax.ShapeDtypeStruct((B, cout, 1), jnp.float32)),
        grid=grid,
        in_specs=[
            pl.BlockSpec((bb, cin, L), lambda b: (b, 0, 0)),       # pipelined x
            # Weights/biases: full arrays, constant index_map -> fetched once.
            pl.BlockSpec((blocks, k2ci, cin), lambda b: (0, 0, 0)),
            pl.BlockSpec((blocks, 2 * ci, 1), lambda b: (0, 0, 0)),
            pl.BlockSpec((blocks, cin, ci), lambda b: (0, 0, 0)),
            pl.BlockSpec((blocks, cin, 1), lambda b: (0, 0, 0)),
            pl.BlockSpec((cin, cin), lambda b: (0, 0)),
            pl.BlockSpec((cin, cin), lambda b: (0, 0)),
            pl.BlockSpec((cin, 1), lambda b: (0, 0)),
            pl.BlockSpec((cout, cin), lambda b: (0, 0)),
            pl.BlockSpec((cout, 1), lambda b: (0, 0)),
        ],
        out_specs=(pl.BlockSpec((bb, cin, L), lambda b: (b, 0, 0)),
                   pl.BlockSpec((bb, cout, 1), lambda b: (b, 0, 0))),
        compiler_params=pltpu.CompilerParams(
            # Batch tiles are independent -> shard across v7x's 2 TensorCores.
            dimension_semantics=("parallel",),
            vmem_limit_bytes=32 * 1024 * 1024,
        ),
    )(x, prepped["fused_w"], prepped["fused_b"], prepped["out_w"],
      prepped["out_b"], prepped["dil_w0"], prepped["dil_w1"],
      prepped["dil_b"], prepped["skip_w"], prepped["skip_b"])

    # stride-2 subsample (glue); outputs are already in torch NCL layout.
    dilated = dil_full[:, :, 0::2]                       # (B, Cin, ceil(L/2))
    return dilated, skip


# ----------------------------------------------------------------------------
# Deterministic synthetic parameters (PyTorch Conv1d weight layout (O, I, K))
# ----------------------------------------------------------------------------
def init_params(key, in_channels, blocks, kernels, channels, out_channels):
    ks = jax.random.split(key, 10)
    s = 0.1
    n = lambda k, shape: s * jax.random.normal(k, shape, jnp.float32)
    return {
        "sig_w": n(ks[0], (blocks, channels, in_channels, kernels)),
        "sig_b": n(ks[1], (blocks, channels)),
        "gate_w": n(ks[2], (blocks, channels, in_channels, kernels)),
        "gate_b": n(ks[3], (blocks, channels)),
        "out_w": n(ks[4], (blocks, in_channels, channels, 1)),
        "out_b": n(ks[5], (blocks, in_channels)),
        "dil_w": n(ks[6], (in_channels, in_channels, 2)),
        "dil_b": n(ks[7], (in_channels,)),
        "skip_w": n(ks[8], (out_channels, in_channels, 1)),
        "skip_b": n(ks[9], (out_channels,)),
    }


# ----------------------------------------------------------------------------
# Pure-JAX reference (mirrors the PyTorch forward exactly, NCL layout, f32)
# ----------------------------------------------------------------------------
def reference_forward(x_ncl, params):
    def conv1d(v, w, b, stride=1, pad_left=0):
        out = jax.lax.conv_general_dilated(
            v, w, window_strides=(stride,), padding=[(pad_left, 0)],
            dimension_numbers=("NCH", "OIH", "NCH"))
        return out + b[None, :, None]

    K = params["sig_w"].shape[-1]
    gated = x_ncl
    for blk in range(params["sig_w"].shape[0]):
        sig = jax.nn.relu(conv1d(gated, params["sig_w"][blk],
                                 params["sig_b"][blk], pad_left=K - 1))
        gate = jax.nn.sigmoid(conv1d(gated, params["gate_w"][blk],
                                     params["gate_b"][blk], pad_left=K - 1))
        gated = gated + conv1d(sig * gate, params["out_w"][blk],
                               params["out_b"][blk])
    dilated = conv1d(gated, params["dil_w"], params["dil_b"],
                     stride=2, pad_left=1)
    skip = conv1d(gated[:, :, -1:], params["skip_w"], params["skip_b"])
    return dilated, skip


if __name__ == "__main__":
    # Desc(blocks=2, kernels=2, channels=8, out_channels=8), in_channels=4
    B, Cin, L = 2, 4, 16
    blocks, kernels, channels, out_channels = 2, 2, 8, 8

    key = jax.random.PRNGKey(0)
    kx, kp = jax.random.split(key)
    x = jax.random.normal(kx, (B, Cin, L), jnp.float32)      # NCL, like PyTorch
    params = init_params(kp, Cin, blocks, kernels, channels, out_channels)
    prepped = prepare_params(params)                         # one-time re-layout

    dilated, skip = jax.block_until_ready(blocks_forward(x, prepped))
    ref_dilated, ref_skip = reference_forward(x, params)

    assert dilated.shape == (B, Cin, L // 2), dilated.shape
    assert skip.shape == (B, out_channels, 1), skip.shape
    # bf16 matmul operands (f32 accumulation) -> bf16-level tolerances.
    np.testing.assert_allclose(np.asarray(dilated), np.asarray(ref_dilated),
                               rtol=2e-2, atol=1e-2)
    np.testing.assert_allclose(np.asarray(skip), np.asarray(ref_skip),
                               rtol=2e-2, atol=1e-2)
    print("KERNEL_OK")
</pallas_src>

<mosaic_0001>
module attributes {stable_mosaic.version = 11 : i64} {
  func.func @_blocks_kernel(%arg0: i32, %arg1: memref<2x4x16xf32, #tpu.memory_space<vmem>>, %arg2: memref<2x32x4xbf16, #tpu.memory_space<vmem>>, %arg3: memref<2x16x1xf32, #tpu.memory_space<vmem>>, %arg4: memref<2x4x8xbf16, #tpu.memory_space<vmem>>, %arg5: memref<2x4x1xf32, #tpu.memory_space<vmem>>, %arg6: memref<4x4xbf16, #tpu.memory_space<vmem>>, %arg7: memref<4x4xbf16, #tpu.memory_space<vmem>>, %arg8: memref<4x1xf32, #tpu.memory_space<vmem>>, %arg9: memref<8x4xbf16, #tpu.memory_space<vmem>>, %arg10: memref<8x1xf32, #tpu.memory_space<vmem>>, %arg11: memref<2x4x16xf32, #tpu.memory_space<vmem>>, %arg12: memref<2x8x1xf32, #tpu.memory_space<vmem>>) attributes {dimension_semantics = [#tpu.dimension_semantics<parallel>], iteration_bounds = array<i64: 1>, scalar_prefetch = 0 : i64, scratch_operands = 0 : i64, tpu.core_type = #tpu.core_type<tc>, window_params = [{transform_indices = @transform_0, window_bounds = array<i64: 2, 4, 16>}, {pipeline_mode = #tpu.pipeline_mode<synchronous>, transform_indices = @transform_1, window_bounds = array<i64: 2, 32, 4>}, {pipeline_mode = #tpu.pipeline_mode<synchronous>, transform_indices = @transform_2, window_bounds = array<i64: 2, 16, 1>}, {pipeline_mode = #tpu.pipeline_mode<synchronous>, transform_indices = @transform_3, window_bounds = array<i64: 2, 4, 8>}, {pipeline_mode = #tpu.pipeline_mode<synchronous>, transform_indices = @transform_4, window_bounds = array<i64: 2, 4, 1>}, {pipeline_mode = #tpu.pipeline_mode<synchronous>, transform_indices = @transform_5, window_bounds = array<i64: 4, 4>}, {pipeline_mode = #tpu.pipeline_mode<synchronous>, transform_indices = @transform_6, window_bounds = array<i64: 4, 4>}, {pipeline_mode = #tpu.pipeline_mode<synchronous>, transform_indices = @transform_7, window_bounds = array<i64: 4, 1>}, {pipeline_mode = #tpu.pipeline_mode<synchronous>, transform_indices = @transform_8, window_bounds = array<i64: 8, 4>}, {pipeline_mode = #tpu.pipeline_mode<synchronous>, transform_indices = @transform_9, window_bounds = array<i64: 8, 1>}, {transform_indices = @transform_10, window_bounds = array<i64: 2, 4, 16>}, {transform_indices = @transform_11, window_bounds = array<i64: 2, 8, 1>}]} {
    %c0 = arith.constant 0 : index
    %c0_0 = arith.constant 0 : index
    %c0_1 = arith.constant 0 : index
    %0 = vector.load %arg1[%c0, %c0_0, %c0_1] : memref<2x4x16xf32, #tpu.memory_space<vmem>>, vector<2x4x16xf32>
    %c0_2 = arith.constant 0 : index
    %c0_3 = arith.constant 0 : index
    %c0_4 = arith.constant 0 : index
    %1 = vector.load %arg2[%c0_2, %c0_3, %c0_4] : memref<2x32x4xbf16, #tpu.memory_space<vmem>>, vector<1x32x4xbf16>
    %2 = vector.shape_cast %1 : vector<1x32x4xbf16> to vector<32x4xbf16>
    %3 = vector.shape_cast %2 : vector<32x4xbf16> to vector<1x32x4xbf16>
    %4 = vector.broadcast %3 : vector<1x32x4xbf16> to vector<2x32x4xbf16>
    %5 = arith.truncf %0 : vector<2x4x16xf32> to vector<2x4x16xbf16>
    %cst = arith.constant dense<0.000000e+00> : vector<2x32x16xf32>
    %6 = tpu.matmul %4, %5, %cst {dimension_numbers = #tpu.dot_dimension_numbers<[2], [1], [1], [2], [0, 0, 0, 1, 1, 2], [0], [0]>} : vector<2x32x4xbf16>, vector<2x4x16xbf16>, vector<2x32x16xf32> -> vector<2x32x16xf32>
    %7 = vector.extract_strided_slice %6 {offsets = [0, 16, 0], sizes = [2, 16, 16], strides = [1, 1, 1]} : vector<2x32x16xf32> to vector<2x16x16xf32>
    %8 = vector.extract_strided_slice %6 {offsets = [0, 0, 0], sizes = [2, 16, 16], strides = [1, 1, 1]} : vector<2x32x16xf32> to vector<2x16x16xf32>
    %c1_i32 = arith.constant 1 : i32
    %9 = tpu.dynamic_rotate %8 by %c1_i32 dim 2 : vector<2x16x16xf32>, i32 -> vector<2x16x16xf32>
    %10 = tpu.iota {dimensions = array<i32: 2>} : vector<2x16x16xi32>
    %c1_i32_5 = arith.constant 1 : i32
    %11 = vector.broadcast %c1_i32_5 : i32 to vector<2x16x16xi32>
    %12 = arith.cmpi sge, %10, %11 : vector<2x16x16xi32>
    %cst_6 = arith.constant 0.000000e+00 : f32
    %13 = vector.broadcast %cst_6 : f32 to vector<2x16x16xf32>
    %14 = arith.select %12, %9, %13 : vector<2x16x16xi1>, vector<2x16x16xf32>
    %15 = arith.addf %7, %14 : vector<2x16x16xf32>
    %c0_7 = arith.constant 0 : index
    %c0_8 = arith.constant 0 : index
    %c0_9 = arith.constant 0 : index
    %16 = vector.load %arg3[%c0_7, %c0_8, %c0_9] : memref<2x16x1xf32, #tpu.memory_space<vmem>>, vector<1x16x1xf32>
    %17 = vector.shape_cast %16 : vector<1x16x1xf32> to vector<16x1xf32>
    %18 = vector.shape_cast %17 : vector<16x1xf32> to vector<1x16x1xf32>
    %19 = vector.broadcast %18 : vector<1x16x1xf32> to vector<2x16x16xf32>
    %20 = arith.addf %15, %19 : vector<2x16x16xf32>
    %21 = vector.extract_strided_slice %20 {offsets = [0, 0, 0], sizes = [2, 8, 16], strides = [1, 1, 1]} : vector<2x16x16xf32> to vector<2x8x16xf32>
    %cst_10 = arith.constant 0.000000e+00 : f32
    %22 = vector.broadcast %cst_10 : f32 to vector<2x8x16xf32>
    %23 = arith.maximumf %21, %22 : vector<2x8x16xf32>
    %24 = vector.extract_strided_slice %20 {offsets = [0, 8, 0], sizes = [2, 8, 16], strides = [1, 1, 1]} : vector<2x16x16xf32> to vector<2x8x16xf32>
    %25 = arith.negf %24 : vector<2x8x16xf32>
    %26 = math.exp %25 : vector<2x8x16xf32>
    %cst_11 = arith.constant 1.000000e+00 : f32
    %27 = vector.broadcast %cst_11 : f32 to vector<2x8x16xf32>
    %28 = arith.addf %27, %26 : vector<2x8x16xf32>
    %29 = arith.divf %27, %28 : vector<2x8x16xf32>
    %30 = arith.mulf %23, %29 : vector<2x8x16xf32>
    %c0_12 = arith.constant 0 : index
    %c0_13 = arith.constant 0 : index
    %c0_14 = arith.constant 0 : index
    %31 = vector.load %arg4[%c0_12, %c0_13, %c0_14] : memref<2x4x8xbf16, #tpu.memory_space<vmem>>, vector<1x4x8xbf16>
    %32 = vector.shape_cast %31 : vector<1x4x8xbf16> to vector<4x8xbf16>
    %33 = vector.shape_cast %32 : vector<4x8xbf16> to vector<1x4x8xbf16>
    %34 = vector.broadcast %33 : vector<1x4x8xbf16> to vector<2x4x8xbf16>
    %35 = arith.truncf %30 : vector<2x8x16xf32> to vector<2x8x16xbf16>
    %cst_15 = arith.constant dense<0.000000e+00> : vector<2x4x16xf32>
    %36 = tpu.matmul %34, %35, %cst_15 {dimension_numbers = #tpu.dot_dimension_numbers<[2], [1], [1], [2], [0, 0, 0, 1, 1, 2], [0], [0]>} : vector<2x4x8xbf16>, vector<2x8x16xbf16>, vector<2x4x16xf32> -> vector<2x4x16xf32>
    %37 = arith.addf %0, %36 : vector<2x4x16xf32>
    %c0_16 = arith.constant 0 : index
    %c0_17 = arith.constant 0 : index
    %c0_18 = arith.constant 0 : index
    %38 = vector.load %arg5[%c0_16, %c0_17, %c0_18] : memref<2x4x1xf32, #tpu.memory_space<vmem>>, vector<1x4x1xf32>
    %39 = vector.shape_cast %38 : vector<1x4x1xf32> to vector<4x1xf32>
    %40 = vector.shape_cast %39 : vector<4x1xf32> to vector<1x4x1xf32>
    %41 = vector.broadcast %40 : vector<1x4x1xf32> to vector<2x4x16xf32>
    %42 = arith.addf %37, %41 : vector<2x4x16xf32>
    %c1 = arith.constant 1 : index
    %c0_19 = arith.constant 0 : index
    %c0_20 = arith.constant 0 : index
    %43 = vector.load %arg2[%c1, %c0_19, %c0_20] : memref<2x32x4xbf16, #tpu.memory_space<vmem>>, vector<1x32x4xbf16>
    %44 = vector.shape_cast %43 : vector<1x32x4xbf16> to vector<32x4xbf16>
    %45 = vector.shape_cast %44 : vector<32x4xbf16> to vector<1x32x4xbf16>
    %46 = vector.broadcast %45 : vector<1x32x4xbf16> to vector<2x32x4xbf16>
    %47 = arith.truncf %42 : vector<2x4x16xf32> to vector<2x4x16xbf16>
    %cst_21 = arith.constant dense<0.000000e+00> : vector<2x32x16xf32>
    %48 = tpu.matmul %46, %47, %cst_21 {dimension_numbers = #tpu.dot_dimension_numbers<[2], [1], [1], [2], [0, 0, 0, 1, 1, 2], [0], [0]>} : vector<2x32x4xbf16>, vector<2x4x16xbf16>, vector<2x32x16xf32> -> vector<2x32x16xf32>
    %49 = vector.extract_strided_slice %48 {offsets = [0, 16, 0], sizes = [2, 16, 16], strides = [1, 1, 1]} : vector<2x32x16xf32> to vector<2x16x16xf32>
    %50 = vector.extract_strided_slice %48 {offsets = [0, 0, 0], sizes = [2, 16, 16], strides = [1, 1, 1]} : vector<2x32x16xf32> to vector<2x16x16xf32>
    %c1_i32_22 = arith.constant 1 : i32
    %51 = tpu.dynamic_rotate %50 by %c1_i32_22 dim 2 : vector<2x16x16xf32>, i32 -> vector<2x16x16xf32>
    %52 = tpu.iota {dimensions = array<i32: 2>} : vector<2x16x16xi32>
    %c1_i32_23 = arith.constant 1 : i32
    %53 = vector.broadcast %c1_i32_23 : i32 to vector<2x16x16xi32>
    %54 = arith.cmpi sge, %52, %53 : vector<2x16x16xi32>
    %cst_24 = arith.constant 0.000000e+00 : f32
    %55 = vector.broadcast %cst_24 : f32 to vector<2x16x16xf32>
    %56 = arith.select %54, %51, %55 : vector<2x16x16xi1>, vector<2x16x16xf32>
    %57 = arith.addf %49, %56 : vector<2x16x16xf32>
    %c1_25 = arith.constant 1 : index
    %c0_26 = arith.constant 0 : index
    %c0_27 = arith.constant 0 : index
    %58 = vector.load %arg3[%c1_25, %c0_26, %c0_27] : memref<2x16x1xf32, #tpu.memory_space<vmem>>, vector<1x16x1xf32>
    %59 = vector.shape_cast %58 : vector<1x16x1xf32> to vector<16x1xf32>
    %60 = vector.shape_cast %59 : vector<16x1xf32> to vector<1x16x1xf32>
    %61 = vector.broadcast %60 : vector<1x16x1xf32> to vector<2x16x16xf32>
    %62 = arith.addf %57, %61 : vector<2x16x16xf32>
    %63 = vector.extract_strided_slice %62 {offsets = [0, 0, 0], sizes = [2, 8, 16], strides = [1, 1, 1]} : vector<2x16x16xf32> to vector<2x8x16xf32>
    %cst_28 = arith.constant 0.000000e+00 : f32
    %64 = vector.broadcast %cst_28 : f32 to vector<2x8x16xf32>
    %65 = arith.maximumf %63, %64 : vector<2x8x16xf32>
    %66 = vector.extract_strided_slice %62 {offsets = [0, 8, 0], sizes = [2, 8, 16], strides = [1, 1, 1]} : vector<2x16x16xf32> to vector<2x8x16xf32>
    %67 = arith.negf %66 : vector<2x8x16xf32>
    %68 = math.exp %67 : vector<2x8x16xf32>
    %cst_29 = arith.constant 1.000000e+00 : f32
    %69 = vector.broadcast %cst_29 : f32 to vector<2x8x16xf32>
    %70 = arith.addf %69, %68 : vector<2x8x16xf32>
    %71 = arith.divf %69, %70 : vector<2x8x16xf32>
    %72 = arith.mulf %65, %71 : vector<2x8x16xf32>
    %c1_30 = arith.constant 1 : index
    %c0_31 = arith.constant 0 : index
    %c0_32 = arith.constant 0 : index
    %73 = vector.load %arg4[%c1_30, %c0_31, %c0_32] : memref<2x4x8xbf16, #tpu.memory_space<vmem>>, vector<1x4x8xbf16>
    %74 = vector.shape_cast %73 : vector<1x4x8xbf16> to vector<4x8xbf16>
    %75 = vector.shape_cast %74 : vector<4x8xbf16> to vector<1x4x8xbf16>
    %76 = vector.broadcast %75 : vector<1x4x8xbf16> to vector<2x4x8xbf16>
    %77 = arith.truncf %72 : vector<2x8x16xf32> to vector<2x8x16xbf16>
    %cst_33 = arith.constant dense<0.000000e+00> : vector<2x4x16xf32>
    %78 = tpu.matmul %76, %77, %cst_33 {dimension_numbers = #tpu.dot_dimension_numbers<[2], [1], [1], [2], [0, 0, 0, 1, 1, 2], [0], [0]>} : vector<2x4x8xbf16>, vector<2x8x16xbf16>, vector<2x4x16xf32> -> vector<2x4x16xf32>
    %79 = arith.addf %42, %78 : vector<2x4x16xf32>
    %c1_34 = arith.constant 1 : index
    %c0_35 = arith.constant 0 : index
    %c0_36 = arith.constant 0 : index
    %80 = vector.load %arg5[%c1_34, %c0_35, %c0_36] : memref<2x4x1xf32, #tpu.memory_space<vmem>>, vector<1x4x1xf32>
    %81 = vector.shape_cast %80 : vector<1x4x1xf32> to vector<4x1xf32>
    %82 = vector.shape_cast %81 : vector<4x1xf32> to vector<1x4x1xf32>
    %83 = vector.broadcast %82 : vector<1x4x1xf32> to vector<2x4x16xf32>
    %84 = arith.addf %79, %83 : vector<2x4x16xf32>
    %c0_37 = arith.constant 0 : index
    %c0_38 = arith.constant 0 : index
    %85 = vector.load %arg6[%c0_37, %c0_38] : memref<4x4xbf16, #tpu.memory_space<vmem>>, vector<4x4xbf16>
    %86 = vector.shape_cast %85 : vector<4x4xbf16> to vector<1x4x4xbf16>
    %87 = vector.broadcast %86 : vector<1x4x4xbf16> to vector<2x4x4xbf16>
    %88 = arith.truncf %84 : vector<2x4x16xf32> to vector<2x4x16xbf16>
    %cst_39 = arith.constant dense<0.000000e+00> : vector<2x4x16xf32>
    %89 = tpu.matmul %87, %88, %cst_39 {dimension_numbers = #tpu.dot_dimension_numbers<[2], [1], [1], [2], [0, 0, 0, 1, 1, 2], [0], [0]>} : vector<2x4x4xbf16>, vector<2x4x16xbf16>, vector<2x4x16xf32> -> vector<2x4x16xf32>
    %c1_i32_40 = arith.constant 1 : i32
    %90 = tpu.dynamic_rotate %89 by %c1_i32_40 dim 2 : vector<2x4x16xf32>, i32 -> vector<2x4x16xf32>
    %91 = tpu.iota {dimensions = array<i32: 2>} : vector<2x4x16xi32>
    %c1_i32_41 = arith.constant 1 : i32
    %92 = vector.broadcast %c1_i32_41 : i32 to vector<2x4x16xi32>
    %93 = arith.cmpi sge, %91, %92 : vector<2x4x16xi32>
    %cst_42 = arith.constant 0.000000e+00 : f32
    %94 = vector.broadcast %cst_42 : f32 to vector<2x4x16xf32>
    %95 = arith.select %93, %90, %94 : vector<2x4x16xi1>, vector<2x4x16xf32>
    %c0_43 = arith.constant 0 : index
    %c0_44 = arith.constant 0 : index
    %96 = vector.load %arg7[%c0_43, %c0_44] : memref<4x4xbf16, #tpu.memory_space<vmem>>, vector<4x4xbf16>
    %97 = vector.shape_cast %96 : vector<4x4xbf16> to vector<1x4x4xbf16>
    %98 = vector.broadcast %97 : vector<1x4x4xbf16> to vector<2x4x4xbf16>
    %99 = arith.truncf %84 : vector<2x4x16xf32> to vector<2x4x16xbf16>
    %cst_45 = arith.constant dense<0.000000e+00> : vector<2x4x16xf32>
    %100 = tpu.matmul %98, %99, %cst_45 {dimension_numbers = #tpu.dot_dimension_numbers<[2], [1], [1], [2], [0, 0, 0, 1, 1, 2], [0], [0]>} : vector<2x4x4xbf16>, vector<2x4x16xbf16>, vector<2x4x16xf32> -> vector<2x4x16xf32>
    %101 = arith.addf %95, %100 : vector<2x4x16xf32>
    %c0_46 = arith.constant 0 : index
    %c0_47 = arith.constant 0 : index
    %102 = vector.load %arg8[%c0_46, %c0_47] : memref<4x1xf32, #tpu.memory_space<vmem>>, vector<4x1xf32>
    %103 = vector.shape_cast %102 : vector<4x1xf32> to vector<1x4x1xf32>
    %104 = vector.broadcast %103 : vector<1x4x1xf32> to vector<2x4x16xf32>
    %105 = arith.addf %101, %104 : vector<2x4x16xf32>
    %c0_48 = arith.constant 0 : index
    %c0_49 = arith.constant 0 : index
    %c0_50 = arith.constant 0 : index
    %106 = vector.load %arg11[%c0_48, %c0_49, %c0_50] : memref<2x4x16xf32, #tpu.memory_space<vmem>>, vector<2x4x16xf32>
    tpu.vector_store %arg11[%c0_48, %c0_49, %c0_50], %105 {strides = array<i32>} : memref<2x4x16xf32, #tpu.memory_space<vmem>>, vector<2x4x16xf32>,
    %107 = vector.extract_strided_slice %84 {offsets = [0, 0, 15], sizes = [2, 4, 1], strides = [1, 1, 1]} : vector<2x4x16xf32> to vector<2x4x1xf32>
    %c0_51 = arith.constant 0 : index
    %c0_52 = arith.constant 0 : index
    %108 = vector.load %arg9[%c0_51, %c0_52] : memref<8x4xbf16, #tpu.memory_space<vmem>>, vector<8x4xbf16>
    %109 = vector.shape_cast %108 : vector<8x4xbf16> to vector<1x8x4xbf16>
    %110 = vector.broadcast %109 : vector<1x8x4xbf16> to vector<2x8x4xbf16>
    %111 = arith.truncf %107 : vector<2x4x1xf32> to vector<2x4x1xbf16>
    %cst_53 = arith.constant dense<0.000000e+00> : vector<2x8x1xf32>
    %112 = tpu.matmul %110, %111, %cst_53 {dimension_numbers = #tpu.dot_dimension_numbers<[2], [1], [1], [2], [0, 0, 0, 1, 1, 2], [0], [0]>} : vector<2x8x4xbf16>, vector<2x4x1xbf16>, vector<2x8x1xf32> -> vector<2x8x1xf32>
    %c0_54 = arith.constant 0 : index
    %c0_55 = arith.constant 0 : index
    %113 = vector.load %arg10[%c0_54, %c0_55] : memref<8x1xf32, #tpu.memory_space<vmem>>, vector<8x1xf32>
    %114 = vector.shape_cast %113 : vector<8x1xf32> to vector<1x8x1xf32>
    %115 = vector.broadcast %114 : vector<1x8x1xf32> to vector<2x8x1xf32>
    %116 = arith.addf %112, %115 : vector<2x8x1xf32>
    %c0_56 = arith.constant 0 : index
    %c0_57 = arith.constant 0 : index
    %c0_58 = arith.constant 0 : index
    %117 = vector.load %arg12[%c0_56, %c0_57, %c0_58] : memref<2x8x1xf32, #tpu.memory_space<vmem>>, vector<2x8x1xf32>
    tpu.vector_store %arg12[%c0_56, %c0_57, %c0_58], %116 {strides = array<i32>} : memref<2x8x1xf32, #tpu.memory_space<vmem>>, vector<2x8x1xf32>,
    return
  }
  func.func @transform_0(%arg0: i32) -> (i32, i32, i32) {
    %c0_i32 = arith.constant 0 : i32
    %c0_i32_0 = arith.constant 0 : i32
    %c0_i32_1 = arith.constant 0 : i32
    return %arg0, %c0_i32, %c0_i32_0 : i32, i32, i32
  }
  func.func @transform_1(%arg0: i32) -> (i32, i32, i32) {
    %c0_i32 = arith.constant 0 : i32
    %c0_i32_0 = arith.constant 0 : i32
    %c0_i32_1 = arith.constant 0 : i32
    %c0_i32_2 = arith.constant 0 : i32
    return %c0_i32, %c0_i32_0, %c0_i32_1 : i32, i32, i32
  }
  func.func @transform_2(%arg0: i32) -> (i32, i32, i32) {
    %c0_i32 = arith.constant 0 : i32
    %c0_i32_0 = arith.constant 0 : i32
    %c0_i32_1 = arith.constant 0 : i32
    %c0_i32_2 = arith.constant 0 : i32
    return %c0_i32, %c0_i32_0, %c0_i32_1 : i32, i32, i32
  }
  func.func @transform_3(%arg0: i32) -> (i32, i32, i32) {
    %c0_i32 = arith.constant 0 : i32
    %c0_i32_0 = arith.constant 0 : i32
    %c0_i32_1 = arith.constant 0 : i32
    %c0_i32_2 = arith.constant 0 : i32
    return %c0_i32, %c0_i32_0, %c0_i32_1 : i32, i32, i32
  }
  func.func @transform_4(%arg0: i32) -> (i32, i32, i32) {
    %c0_i32 = arith.constant 0 : i32
    %c0_i32_0 = arith.constant 0 : i32
    %c0_i32_1 = arith.constant 0 : i32
    %c0_i32_2 = arith.constant 0 : i32
    return %c0_i32, %c0_i32_0, %c0_i32_1 : i32, i32, i32
  }
  func.func @transform_5(%arg0: i32) -> (i32, i32) {
    %c0_i32 = arith.constant 0 : i32
    %c0_i32_0 = arith.constant 0 : i32
    %c0_i32_1 = arith.constant 0 : i32
    return %c0_i32, %c0_i32_0 : i32, i32
  }
  func.func @transform_6(%arg0: i32) -> (i32, i32) {
    %c0_i32 = arith.constant 0 : i32
    %c0_i32_0 = arith.constant 0 : i32
    %c0_i32_1 = arith.constant 0 : i32
    return %c0_i32, %c0_i32_0 : i32, i32
  }
  func.func @transform_7(%arg0: i32) -> (i32, i32) {
    %c0_i32 = arith.constant 0 : i32
    %c0_i32_0 = arith.constant 0 : i32
    %c0_i32_1 = arith.constant 0 : i32
    return %c0_i32, %c0_i32_0 : i32, i32
  }
  func.func @transform_8(%arg0: i32) -> (i32, i32) {
    %c0_i32 = arith.constant 0 : i32
    %c0_i32_0 = arith.constant 0 : i32
    %c0_i32_1 = arith.constant 0 : i32
    return %c0_i32, %c0_i32_0 : i32, i32
  }
  func.func @transform_9(%arg0: i32) -> (i32, i32) {
    %c0_i32 = arith.constant 0 : i32
    %c0_i32_0 = arith.constant 0 : i32
    %c0_i32_1 = arith.constant 0 : i32
    return %c0_i32, %c0_i32_0 : i32, i32
  }
  func.func @transform_10(%arg0: i32) -> (i32, i32, i32) {
    %c0_i32 = arith.constant 0 : i32
    %c0_i32_0 = arith.constant 0 : i32
    %c0_i32_1 = arith.constant 0 : i32
    return %arg0, %c0_i32, %c0_i32_0 : i32, i32, i32
  }
  func.func @transform_11(%arg0: i32) -> (i32, i32, i32) {
    %c0_i32 = arith.constant 0 : i32
    %c0_i32_0 = arith.constant 0 : i32
    %c0_i32_1 = arith.constant 0 : i32
    return %arg0, %c0_i32, %c0_i32_0 : i32, i32, i32
  }
}

</mosaic_0001>

<llo_original>
// kernel: blocks_forward.1
$region0: #{blocks_forward.1}
  #allocation0 [shape = 'u32[]', space=smem, size = 0x4, offset = 0x4, fixed_abs, tag = 'smem constant byte address 0x4 - core index']
  #allocation1 [shape = 'u32[144,128]{1,0:T(1,128)}', space=vmem, size = 0x12000, scoped, tag = 'internal scratch']
  %s0 = inlined_call_operand.vmem [shape: f32[2,4,16], index: 0, kind: input, shape index: {}]
  %s1 = inlined_call_operand.vmem [shape: bf16[2,32,4], index: 1, kind: input, shape index: {}]
  %s2 = inlined_call_operand.vmem [shape: f32[2,16,1], index: 2, kind: input, shape index: {}]
  %s3 = inlined_call_operand.vmem [shape: bf16[2,4,8], index: 3, kind: input, shape index: {}]
  %s4 = inlined_call_operand.vmem [shape: f32[2,4,1], index: 4, kind: input, shape index: {}]
  %s5 = inlined_call_operand.vmem [shape: bf16[4,4], index: 5, kind: input, shape index: {}]
  %s6 = inlined_call_operand.vmem [shape: bf16[4,4], index: 6, kind: input, shape index: {}]
  %s7 = inlined_call_operand.vmem [shape: f32[4,1], index: 7, kind: input, shape index: {}]
  %s8 = inlined_call_operand.vmem [shape: bf16[8,4], index: 8, kind: input, shape index: {}]
  %s9 = inlined_call_operand.vmem [shape: f32[8,1], index: 9, kind: input, shape index: {}]
  %s10 = inlined_call_operand.vmem [shape: f32[2,4,16], index: 10, kind: output, shape index: {0}]
  %s11 = inlined_call_operand.vmem [shape: f32[2,8,1], index: 11, kind: output, shape index: {1}]
  %12 = xla_tuple %s10, %s11
  %s13 = sld [smem:[#allocation0]]
  $region58: #{blocks_forward.1} parent=0
    _
  %s15 = ssub.s32 1, %s13
  %s16 = scalar_select 0, %s15, %s13
  // Predicated region
  $region2: #{blocks_forward.1} parent=0 // pred_check
    _
  $region3: #{blocks_forward.1} parent=0 // pred_check_branch
    %18 = sbr.rel (0) target = $region5
  $region4: #{blocks_forward.1} parent=0 // pred_region
    _
  $region5: #{blocks_forward.1} parent=0 // pred_fallthru
    _
  // Predicated region
  $region6: #{blocks_forward.1} parent=0 // pred_check
    _
  $region7: #{blocks_forward.1} parent=0 // pred_check_branch
    %20 = sbr.rel (0) target = $region9
  $region8: #{blocks_forward.1} parent=0 // pred_region
    _
  $region9: #{blocks_forward.1} parent=0 // pred_fallthru
    _
  // Predicated region
  $region10: #{blocks_forward.1} parent=0 // pred_check
    _
  $region11: #{blocks_forward.1} parent=0 // pred_check_branch
    %22 = sbr.rel (0) target = $region13
  $region12: #{blocks_forward.1} parent=0 // pred_region
    _
  $region13: #{blocks_forward.1} parent=0 // pred_fallthru
    _
  // Predicated region
  $region14: #{blocks_forward.1} parent=0 // pred_check
    _
  $region15: #{blocks_forward.1} parent=0 // pred_check_branch
    %24 = sbr.rel (0) target = $region17
  $region16: #{blocks_forward.1} parent=0 // pred_region
    _
  $region17: #{blocks_forward.1} parent=0 // pred_fallthru
    _
  // Predicated region
  $region18: #{blocks_forward.1} parent=0 // pred_check
    _
  $region19: #{blocks_forward.1} parent=0 // pred_check_branch
    %26 = sbr.rel (0) target = $region21
  $region20: #{blocks_forward.1} parent=0 // pred_region
    _
  $region21: #{blocks_forward.1} parent=0 // pred_fallthru
    _
  // Predicated region
  $region22: #{blocks_forward.1} parent=0 // pred_check
    _
  $region23: #{blocks_forward.1} parent=0 // pred_check_branch
    %28 = sbr.rel (0) target = $region25
  $region24: #{blocks_forward.1} parent=0 // pred_region
    _
  $region25: #{blocks_forward.1} parent=0 // pred_fallthru
    _
  // Predicated region
  $region26: #{blocks_forward.1} parent=0 // pred_check
    _
  $region27: #{blocks_forward.1} parent=0 // pred_check_branch
    %30 = sbr.rel (0) target = $region29
  $region28: #{blocks_forward.1} parent=0 // pred_region
    _
  $region29: #{blocks_forward.1} parent=0 // pred_fallthru
    _
  // Predicated region
  $region30: #{blocks_forward.1} parent=0 // pred_check
    _
  $region31: #{blocks_forward.1} parent=0 // pred_check_branch
    %32 = sbr.rel (0) target = $region33
  $region32: #{blocks_forward.1} parent=0 // pred_region
    _
  $region33: #{blocks_forward.1} parent=0 // pred_fallthru
    _
  // Predicated region
  $region34: #{blocks_forward.1} parent=0 // pred_check
    _
  $region35: #{blocks_forward.1} parent=0 // pred_check_branch
    %34 = sbr.rel (0) target = $region37
  $region36: #{blocks_forward.1} parent=0 // pred_region
    _
  $region37: #{blocks_forward.1} parent=0 // pred_fallthru
    _
  // Predicated region
  $region38: #{blocks_forward.1} parent=0 // pred_check
    _
  $region39: #{blocks_forward.1} parent=0 // pred_check_branch
    %36 = sbr.rel (0) target = $region41
  $region40: #{blocks_forward.1} parent=0 // pred_region
    _
  $region41: #{blocks_forward.1} parent=0 // pred_fallthru
    _
  %v38 = vld [vmem:[%s0] sm:$0xf]
  %v39 = vld [vmem:[%s0 + $0x4] sm:$0xf]
  %v40 = vld [vmem:[%s1] sm:$0xf]
  %v41 = vld [vmem:[%s1 + $0x4] sm:$0xf]
  %v42 = vld [vmem:[%s1 + $0x8] sm:$0xf]
  %v43 = vld [vmem:[%s1 + $0xc] sm:$0xf]
  %v44 = vpack.c.bf16 %v38, %v38
  %v45 = vpack.c.bf16 %v39, %v39
  %v50 = vunpack.c.l.b16 %v40
  %v51 = vunpack.c.l.b16 %v41
  %v52 = vunpack.c.l.b16 %v42
  %v53 = vunpack.c.l.b16 %v43
  %v54 = vpack.c.b16 %v51, %v50
  %v55 = vpack.c.b16 %v53, %v52
  %vm56 = vcmask 31744
  %v58 = vsel %vm56, %v54, 0
  %v61 = vsel %vm56, %v55, 0
  %vm63 = vcmask 1041408
  %v65 = vsel %vm63, %v44, 0
  %67 = vmatprep.subr.bf16.mxu0 0
  %68 = vmatpush1.bf16.msra.mxu0 0
  %69 = vmatprep.subr.bf16.mxu0 0
  %70 = vmatpush1.bf16.msra.mxu0 0
  %71 = vmatprep.subr.bf16.mxu0 0
  %72 = vmatpush1.bf16.msra.mxu0 0
  %73 = vmatprep.subr.bf16.mxu0 0
  %74 = vmatpush1.bf16.msra.mxu0 0
  %75 = vmatprep.subr.bf16.mxu0 0
  %76 = vmatpush1.bf16.msra.mxu0 0
  %77 = vmatprep.subr.bf16.mxu0 0
  %78 = vmatpush1.bf16.msra.mxu0 0
  %79 = vmatprep.subr.bf16.mxu0 0
  %80 = vmatpush1.bf16.msra.mxu0 0
  %81 = vmatprep.subr.bf16.mxu0 0
  %82 = vmatpush1.bf16.msra.mxu0 %v65
  %83 = vmatprep.subr.bf16.mxu0 0
  %84 = vmatpush2.bf16.msra.mxu0 0
  %85 = vmatprep.subr.bf16.mxu0 0
  %86 = vmatpush2.bf16.msra.mxu0 0
  %87 = vmatprep.subr.bf16.mxu0 0
  %88 = vmatpush2.bf16.msra.mxu0 0
  %89 = vmatprep.subr.bf16.mxu0 0
  %90 = vmatpush2.bf16.msra.mxu0 0
  %91 = vmatprep.subr.bf16.mxu0 0
  %92 = vmatpush2.bf16.msra.mxu0 0
  %93 = vmatprep.subr.bf16.mxu0 0
  %94 = vmatpush2.bf16.msra.mxu0 0
  %95 = vmatprep.subr.bf16.mxu0 0
  %96 = vmatpush2.bf16.msra.mxu0 0
  %97 = vmatprep.subr.bf16.mxu0 0
  %98 = vmatpush2.bf16.msra.mxu0 0
  %99 = vmatprep.mubr.bf16.mxu0 0
  %100 = vmatmul.mubr.bf16.gmra.mxu0 %v58
  %v101 = vpop.f32.mrf.mxu0
  %v102 = vadd.f32 0.0, %v101
  %v103 = vpop.f32.mrf.mxu0
  %v104 = vpop.f32.mrf.mxu0
  %v105 = vadd.f32 0.0, %v104
  %v106 = vpop.f32.mrf.mxu0
  %107 = vmatprep.mubr.bf16.mxu0 0
  %108 = vmatmul.mubr.bf16.gmra.mxu0 %v61
  %v109 = vpop.f32.mrf.mxu0
  %v110 = vadd.f32 0.0, %v109
  %v111 = vpop.f32.mrf.mxu0
  %v112 = vpop.f32.mrf.mxu0
  %v113 = vadd.f32 0.0, %v112
  %v114 = vpop.f32.mrf.mxu0
  %115 = vdwg.mxu0
  %v117 = vsel %vm63, %v45, 0
  %119 = vmatprep.subr.bf16.mxu0 0
  %120 = vmatpush1.bf16.msra.mxu0 0
  %121 = vmatprep.subr.bf16.mxu0 0
  %122 = vmatpush1.bf16.msra.mxu0 0
  %123 = vmatprep.subr.bf16.mxu0 0
  %124 = vmatpush1.bf16.msra.mxu0 0
  %125 = vmatprep.subr.bf16.mxu0 0
  %126 = vmatpush1.bf16.msra.mxu0 0
  %127 = vmatprep.subr.bf16.mxu0 0
  %128 = vmatpush1.bf16.msra.mxu0 0
  %129 = vmatprep.subr.bf16.mxu0 0
  %130 = vmatpush1.bf16.msra.mxu0 0
  %131 = vmatprep.subr.bf16.mxu0 0
  %132 = vmatpush1.bf16.msra.mxu0 0
  %133 = vmatprep.subr.bf16.mxu0 0
  %134 = vmatpush1.bf16.msra.mxu0 %v117
  %135 = vmatprep.subr.bf16.mxu0 0
  %136 = vmatpush2.bf16.msra.mxu0 0
  %137 = vmatprep.subr.bf16.mxu0 0
  %138 = vmatpush2.bf16.msra.mxu0 0
  %139 = vmatprep.subr.bf16.mxu0 0
  %140 = vmatpush2.bf16.msra.mxu0 0
  %141 = vmatprep.subr.bf16.mxu0 0
  %142 = vmatpush2.bf16.msra.mxu0 0
  %143 = vmatprep.subr.bf16.mxu0 0
  %144 = vmatpush2.bf16.msra.mxu0 0
  %145 = vmatprep.subr.bf16.mxu0 0
  %146 = vmatpush2.bf16.msra.mxu0 0
  %147 = vmatprep.subr.bf16.mxu0 0
  %148 = vmatpush2.bf16.msra.mxu0 0
  %149 = vmatprep.subr.bf16.mxu0 0
  %150 = vmatpush2.bf16.msra.mxu0 0
  %151 = vmatprep.mubr.bf16.mxu0 0
  %152 = vmatmul.mubr.bf16.gmra.mxu0 %v58
  %v153 = vpop.f32.mrf.mxu0
  %v154 = vadd.f32 0.0, %v153
  %v155 = vpop.f32.mrf.mxu0
  %v156 = vpop.f32.mrf.mxu0
  %v157 = vadd.f32 0.0, %v156
  %v158 = vpop.f32.mrf.mxu0
  %159 = vmatprep.mubr.bf16.mxu0 0
  %160 = vmatmul.mubr.bf16.gmra.mxu0 %v61
  %v161 = vpop.f32.mrf.mxu0
  %v162 = vadd.f32 0.0, %v161
  %v163 = vpop.f32.mrf.mxu0
  %v164 = vpop.f32.mrf.mxu0
  %v165 = vadd.f32 0.0, %v164
  %v166 = vpop.f32.mrf.mxu0
  %167 = vdwg.mxu0
  %vm168 = vcmask 1047680
  %169 = vrot.lane.b32.xlu0 %v102, 16
  %v170 = vpop.permute.xlu0 %169
  %v171 = vsel %vm168, %v170, %v102
  %172 = vrot.lane.b32.xlu0 %v105, 16
  %v173 = vpop.permute.xlu0 %172
  %v174 = vsel %vm168, %v173, %v105
  %175 = vrot.lane.b32.xlu0 %v154, 16
  %v176 = vpop.permute.xlu0 %175
  %v177 = vsel %vm168, %v176, %v154
  %178 = vrot.lane.b32.xlu0 %v157, 16
  %v179 = vpop.permute.xlu0 %178
  %v180 = vsel %vm168, %v179, %v157
  %181 = vrot.lane.b32.xlu0 %v171, 16
  %v182 = vpop.permute.xlu0 %181
  %183 = vrot.lane.b32.xlu0 %v174, 16
  %v184 = vpop.permute.xlu0 %183
  %185 = vrot.lane.b32.xlu0 %v177, 16
  %v186 = vpop.permute.xlu0 %185
  %187 = vrot.lane.b32.xlu0 %v180, 16
  %v188 = vpop.permute.xlu0 %187
  %v189 = vsel %vm168, %v182, %v102
  %v190 = vsel %vm168, %v184, %v105
  %v191 = vsel %vm168, %v186, %v154
  %v192 = vsel %vm168, %v188, %v157
  %v193 = vlaneseq
  %v194 = vand.u32 %v193, 127
  %vm195 = vcmp.ge.s32.totalorder %v194, 1
  %200 = vrot.lane.b32.xlu0 %v189, 113
  %v201 = vpop.permute.xlu0 %200
  %202 = vrot.lane.b32.xlu0 %v190, 113
  %v203 = vpop.permute.xlu0 %202
  %204 = vrot.lane.b32.xlu0 %v191, 113
  %v205 = vpop.permute.xlu0 %204
  %206 = vrot.lane.b32.xlu0 %v192, 113
  %v207 = vpop.permute.xlu0 %206
  %v212 = vsel %vm195, %v201, 0.0
  %v213 = vsel %vm195, %v203, 0.0
  %v214 = vsel %vm195, %v205, 0.0
  %v215 = vsel %vm195, %v207, 0.0
  %v216 = vadd.f32 %v110, %v212
  %v217 = vadd.f32 %v113, %v213
  %v218 = vadd.f32 %v162, %v214
  %v219 = vadd.f32 %v165, %v215
  %v220 = vld [vmem:[%s2] sm:$0xff]
  %v221 = vld [vmem:[%s2 + $0x8] sm:$0xff]
  %223 = vset.pattern.permute.xlu0 0
  %224 = vperm.xlu0 %223, %v220
  %v225 = vpop.permute.xlu0 %224
  %228 = vset.pattern.permute.xlu0 0
  %229 = vperm.xlu0 %228, %v221
  %v230 = vpop.permute.xlu0 %229
  %v232 = vadd.f32 %v216, %v225
  %v233 = vadd.f32 %v217, %v230
  %v234 = vadd.f32 %v218, %v225
  %v235 = vadd.f32 %v219, %v230
  %v236 = vmax.f32 %v232, 0.0
  %v237 = vmax.f32 %v234, 0.0
  %v238 = vxor.u32 %v233, 2147483648
  %v239 = vxor.u32 %v235, 2147483648
  %v240 = vmul.f32 %v238, 1.442695
  %v241 = vpow.pop %v240
  %v242 = vmul.f32 %v239, 1.442695
  %v243 = vpow.pop %v242
  %v244 = vadd.f32 %v241, 1.0
  %v245 = vadd.f32 %v243, 1.0
  %v246 = vrcp.pop %v244
  %v247 = vmul.f32 1.0, %v246
  %v248 = vrcp.pop %v245
  %v249 = vmul.f32 1.0, %v248
  %v250 = vmul.f32 %v236, %v247
  %v251 = vmul.f32 %v237, %v249
  %v252 = vld [vmem:[%s3] sm:$0x3]
  %v253 = vpack.c.bf16 %v250, %v250
  %v254 = vpack.c.bf16 %v251, %v251
  %vm255 = vcmask 64512
  %v257 = vsel %vm255, %v252, 0
  %vm259 = vcmask 1043456
  %v261 = vsel %vm259, %v253, 0
  %263 = vmatprep.subr.bf16.mxu0 0
  %264 = vmatpush1.bf16.msra.mxu0 0
  %265 = vmatprep.subr.bf16.mxu0 0
  %266 = vmatpush1.bf16.msra.mxu0 0
  %267 = vmatprep.subr.bf16.mxu0 0
  %268 = vmatpush1.bf16.msra.mxu0 0
  %269 = vmatprep.subr.bf16.mxu0 0
  %270 = vmatpush1.bf16.msra.mxu0 0
  %271 = vmatprep.subr.bf16.mxu0 0
  %272 = vmatpush1.bf16.msra.mxu0 0
  %273 = vmatprep.subr.bf16.mxu0 0
  %274 = vmatpush1.bf16.msra.mxu0 0
  %275 = vmatprep.subr.bf16.mxu0 0
  %276 = vmatpush1.bf16.msra.mxu0 0
  %277 = vmatprep.subr.bf16.mxu0 0
  %278 = vmatpush1.bf16.msra.mxu0 %v261
  %279 = vmatprep.subr.bf16.mxu0 0
  %280 = vmatpush2.bf16.msra.mxu0 0
  %281 = vmatprep.subr.bf16.mxu0 0
  %282 = vmatpush2.bf16.msra.mxu0 0
  %283 = vmatprep.subr.bf16.mxu0 0
  %284 = vmatpush2.bf16.msra.mxu0 0
  %285 = vmatprep.subr.bf16.mxu0 0
  %286 = vmatpush2.bf16.msra.mxu0 0
  %287 = vmatprep.subr.bf16.mxu0 0
  %288 = vmatpush2.bf16.msra.mxu0 0
  %289 = vmatprep.subr.bf16.mxu0 0
  %290 = vmatpush2.bf16.msra.mxu0 0
  %291 = vmatprep.subr.bf16.mxu0 0
  %292 = vmatpush2.bf16.msra.mxu0 0
  %293 = vmatprep.subr.bf16.mxu0 0
  %294 = vmatpush2.bf16.msra.mxu0 0
  %295 = vmatprep.mubr.bf16.mxu0 0
  %296 = vmatmul.mubr.bf16.gmra.mxu0 %v257
  %v297 = vpop.f32.mrf.mxu0
  %v298 = vadd.f32 0.0, %v297
  %v299 = vpop.f32.mrf.mxu0
  %v300 = vpop.f32.mrf.mxu0
  %v301 = vpop.f32.mrf.mxu0
  %302 = vdwg.mxu0
  %v304 = vsel %vm259, %v254, 0
  %306 = vmatprep.subr.bf16.mxu0 0
  %307 = vmatpush1.bf16.msra.mxu0 0
  %308 = vmatprep.subr.bf16.mxu0 0
  %309 = vmatpush1.bf16.msra.mxu0 0
  %310 = vmatprep.subr.bf16.mxu0 0
  %311 = vmatpush1.bf16.msra.mxu0 0
  %312 = vmatprep.subr.bf16.mxu0 0
  %313 = vmatpush1.bf16.msra.mxu0 0
  %314 = vmatprep.subr.bf16.mxu0 0
  %315 = vmatpush1.bf16.msra.mxu0 0
  %316 = vmatprep.subr.bf16.mxu0 0
  %317 = vmatpush1.bf16.msra.mxu0 0
  %318 = vmatprep.subr.bf16.mxu0 0
  %319 = vmatpush1.bf16.msra.mxu0 0
  %320 = vmatprep.subr.bf16.mxu0 0
  %321 = vmatpush1.bf16.msra.mxu0 %v304
  %322 = vmatprep.subr.bf16.mxu0 0
  %323 = vmatpush2.bf16.msra.mxu0 0
  %324 = vmatprep.subr.bf16.mxu0 0
  %325 = vmatpush2.bf16.msra.mxu0 0
  %326 = vmatprep.subr.bf16.mxu0 0
  %327 = vmatpush2.bf16.msra.mxu0 0
  %328 = vmatprep.subr.bf16.mxu0 0
  %329 = vmatpush2.bf16.msra.mxu0 0
  %330 = vmatprep.subr.bf16.mxu0 0
  %331 = vmatpush2.bf16.msra.mxu0 0
  %332 = vmatprep.subr.bf16.mxu0 0
  %333 = vmatpush2.bf16.msra.mxu0 0
  %334 = vmatprep.subr.bf16.mxu0 0
  %335 = vmatpush2.bf16.msra.mxu0 0
  %336 = vmatprep.subr.bf16.mxu0 0
  %337 = vmatpush2.bf16.msra.mxu0 0
  %338 = vmatprep.mubr.bf16.mxu0 0
  %339 = vmatmul.mubr.bf16.gmra.mxu0 %v257
  %v340 = vpop.f32.mrf.mxu0
  %v341 = vadd.f32 0.0, %v340
  %v342 = vpop.f32.mrf.mxu0
  %v343 = vpop.f32.mrf.mxu0
  %v344 = vpop.f32.mrf.mxu0
  %345 = vdwg.mxu0
  %v346 = vadd.f32 %v38, %v298
  %v347 = vadd.f32 %v39, %v341
  %v348 = vld [vmem:[%s4] sm:$0xf]
  %350 = vset.pattern.permute.xlu0 0
  %351 = vperm.xlu0 %350, %v348
  %v352 = vpop.permute.xlu0 %351
  %v354 = vadd.f32 %v346, %v352
  %v355 = vadd.f32 %v347, %v352
  %s356 = scalar_lea.vmem %s1, 16
  %v357 = vld [vmem:[%s356] sm:$0xf]
  %v358 = vld [vmem:[%s356 + $0x4] sm:$0xf]
  %v359 = vld [vmem:[%s356 + $0x8] sm:$0xf]
  %v360 = vld [vmem:[%s356 + $0xc] sm:$0xf]
  %v361 = vpack.c.bf16 %v354, %v354
  %v362 = vpack.c.bf16 %v355, %v355
  %v367 = vunpack.c.l.b16 %v357
  %v368 = vunpack.c.l.b16 %v358
  %v369 = vunpack.c.l.b16 %v359
  %v370 = vunpack.c.l.b16 %v360
  %v371 = vpack.c.b16 %v368, %v367
  %v372 = vpack.c.b16 %v370, %v369
  %v374 = vsel %vm56, %v371, 0
  %v377 = vsel %vm56, %v372, 0
  %v380 = vsel %vm63, %v361, 0
  %382 = vmatprep.subr.bf16.mxu0 0
  %383 = vmatpush1.bf16.msra.mxu0 0
  %384 = vmatprep.subr.bf16.mxu0 0
  %385 = vmatpush1.bf16.msra.mxu0 0
  %386 = vmatprep.subr.bf16.mxu0 0
  %387 = vmatpush1.bf16.msra.mxu0 0
  %388 = vmatprep.subr.bf16.mxu0 0
  %389 = vmatpush1.bf16.msra.mxu0 0
  %390 = vmatprep.subr.bf16.mxu0 0
  %391 = vmatpush1.bf16.msra.mxu0 0
  %392 = vmatprep.subr.bf16.mxu0 0
  %393 = vmatpush1.bf16.msra.mxu0 0
  %394 = vmatprep.subr.bf16.mxu0 0
  %395 = vmatpush1.bf16.msra.mxu0 0
  %396 = vmatprep.subr.bf16.mxu0 0
  %397 = vmatpush1.bf16.msra.mxu0 %v380
  %398 = vmatprep.subr.bf16.mxu0 0
  %399 = vmatpush2.bf16.msra.mxu0 0
  %400 = vmatprep.subr.bf16.mxu0 0
  %401 = vmatpush2.bf16.msra.mxu0 0
  %402 = vmatprep.subr.bf16.mxu0 0
  %403 = vmatpush2.bf16.msra.mxu0 0
  %404 = vmatprep.subr.bf16.mxu0 0
  %405 = vmatpush2.bf16.msra.mxu0 0
  %406 = vmatprep.subr.bf16.mxu0 0
  %407 = vmatpush2.bf16.msra.mxu0 0
  %408 = vmatprep.subr.bf16.mxu0 0
  %409 = vmatpush2.bf16.msra.mxu0 0
  %410 = vmatprep.subr.bf16.mxu0 0
  %411 = vmatpush2.bf16.msra.mxu0 0
  %412 = vmatprep.subr.bf16.mxu0 0
  %413 = vmatpush2.bf16.msra.mxu0 0
  %414 = vmatprep.mubr.bf16.mxu0 0
  %415 = vmatmul.mubr.bf16.gmra.mxu0 %v374
  %v416 = vpop.f32.mrf.mxu0
  %v417 = vadd.f32 0.0, %v416
  %v418 = vpop.f32.mrf.mxu0
  %v419 = vpop.f32.mrf.mxu0
  %v420 = vadd.f32 0.0, %v419
  %v421 = vpop.f32.mrf.mxu0
  %422 = vmatprep.mubr.bf16.mxu0 0
  %423 = vmatmul.mubr.bf16.gmra.mxu0 %v377
  %v424 = vpop.f32.mrf.mxu0
  %v425 = vadd.f32 0.0, %v424
  %v426 = vpop.f32.mrf.mxu0
  %v427 = vpop.f32.mrf.mxu0
  %v428 = vadd.f32 0.0, %v427
  %v429 = vpop.f32.mrf.mxu0
  %430 = vdwg.mxu0
  %v432 = vsel %vm63, %v362, 0
  %434 = vmatprep.subr.bf16.mxu0 0
  %435 = vmatpush1.bf16.msra.mxu0 0
  %436 = vmatprep.subr.bf16.mxu0 0
  %437 = vmatpush1.bf16.msra.mxu0 0
  %438 = vmatprep.subr.bf16.mxu0 0
  %439 = vmatpush1.bf16.msra.mxu0 0
  %440 = vmatprep.subr.bf16.mxu0 0
  %441 = vmatpush1.bf16.msra.mxu0 0
  %442 = vmatprep.subr.bf16.mxu0 0
  %443 = vmatpush1.bf16.msra.mxu0 0
  %444 = vmatprep.subr.bf16.mxu0 0
  %445 = vmatpush1.bf16.msra.mxu0 0
  %446 = vmatprep.subr.bf16.mxu0 0
  %447 = vmatpush1.bf16.msra.mxu0 0
  %448 = vmatprep.subr.bf16.mxu0 0
  %449 = vmatpush1.bf16.msra.mxu0 %v432
  %450 = vmatprep.subr.bf16.mxu0 0
  %451 = vmatpush2.bf16.msra.mxu0 0
  %452 = vmatprep.subr.bf16.mxu0 0
  %453 = vmatpush2.bf16.msra.mxu0 0
  %454 = vmatprep.subr.bf16.mxu0 0
  %455 = vmatpush2.bf16.msra.mxu0 0
  %456 = vmatprep.subr.bf16.mxu0 0
  %457 = vmatpush2.bf16.msra.mxu0 0
  %458 = vmatprep.subr.bf16.mxu0 0
  %459 = vmatpush2.bf16.msra.mxu0 0
  %460 = vmatprep.subr.bf16.mxu0 0
  %461 = vmatpush2.bf16.msra.mxu0 0
  %462 = vmatprep.subr.bf16.mxu0 0
  %463 = vmatpush2.bf16.msra.mxu0 0
  %464 = vmatprep.subr.bf16.mxu0 0
  %465 = vmatpush2.bf16.msra.mxu0 0
  %466 = vmatprep.mubr.bf16.mxu0 0
  %467 = vmatmul.mubr.bf16.gmra.mxu0 %v374
  %v468 = vpop.f32.mrf.mxu0
  %v469 = vadd.f32 0.0, %v468
  %v470 = vpop.f32.mrf.mxu0
  %v471 = vpop.f32.mrf.mxu0
  %v472 = vadd.f32 0.0, %v471
  %v473 = vpop.f32.mrf.mxu0
  %474 = vmatprep.mubr.bf16.mxu0 0
  %475 = vmatmul.mubr.bf16.gmra.mxu0 %v377
  %v476 = vpop.f32.mrf.mxu0
  %v477 = vadd.f32 0.0, %v476
  %v478 = vpop.f32.mrf.mxu0
  %v479 = vpop.f32.mrf.mxu0
  %v480 = vadd.f32 0.0, %v479
  %v481 = vpop.f32.mrf.mxu0
  %482 = vdwg.mxu0
  %483 = vrot.lane.b32.xlu0 %v417, 16
  %v484 = vpop.permute.xlu0 %483
  %v485 = vsel %vm168, %v484, %v417
  %486 = vrot.lane.b32.xlu0 %v420, 16
  %v487 = vpop.permute.xlu0 %486
  %v488 = vsel %vm168, %v487, %v420
  %489 = vrot.lane.b32.xlu0 %v469, 16
  %v490 = vpop.permute.xlu0 %489
  %v491 = vsel %vm168, %v490, %v469
  %492 = vrot.lane.b32.xlu0 %v472, 16
  %v493 = vpop.permute.xlu0 %492
  %v494 = vsel %vm168, %v493, %v472
  %495 = vrot.lane.b32.xlu0 %v485, 16
  %v496 = vpop.permute.xlu0 %495
  %497 = vrot.lane.b32.xlu0 %v488, 16
  %v498 = vpop.permute.xlu0 %497
  %499 = vrot.lane.b32.xlu0 %v491, 16
  %v500 = vpop.permute.xlu0 %499
  %501 = vrot.lane.b32.xlu0 %v494, 16
  %v502 = vpop.permute.xlu0 %501
  %v503 = vsel %vm168, %v496, %v417
  %v504 = vsel %vm168, %v498, %v420
  %v505 = vsel %vm168, %v500, %v469
  %v506 = vsel %vm168, %v502, %v472
  %511 = vrot.lane.b32.xlu0 %v503, 113
  %v512 = vpop.permute.xlu0 %511
  %513 = vrot.lane.b32.xlu0 %v504, 113
  %v514 = vpop.permute.xlu0 %513
  %515 = vrot.lane.b32.xlu0 %v505, 113
  %v516 = vpop.permute.xlu0 %515
  %517 = vrot.lane.b32.xlu0 %v506, 113
  %v518 = vpop.permute.xlu0 %517
  %v523 = vsel %vm195, %v512, 0.0
  %v524 = vsel %vm195, %v514, 0.0
  %v525 = vsel %vm195, %v516, 0.0
  %v526 = vsel %vm195, %v518, 0.0
  %v527 = vadd.f32 %v425, %v523
  %v528 = vadd.f32 %v428, %v524
  %v529 = vadd.f32 %v477, %v525
  %v530 = vadd.f32 %v480, %v526
  %s531 = scalar_lea.vmem %s2, 16
  %v532 = vld [vmem:[%s531] sm:$0xff]
  %v533 = vld [vmem:[%s531 + $0x8] sm:$0xff]
  %535 = vset.pattern.permute.xlu0 0
  %536 = vperm.xlu0 %535, %v532
  %v537 = vpop.permute.xlu0 %536
  %540 = vset.pattern.permute.xlu0 0
  %541 = vperm.xlu0 %540, %v533
  %v542 = vpop.permute.xlu0 %541
  %v544 = vadd.f32 %v527, %v537
  %v545 = vadd.f32 %v528, %v542
  %v546 = vadd.f32 %v529, %v537
  %v547 = vadd.f32 %v530, %v542
  %v548 = vmax.f32 %v544, 0.0
  %v549 = vmax.f32 %v546, 0.0
  %v550 = vxor.u32 %v545, 2147483648
  %v551 = vxor.u32 %v547, 2147483648
  %v552 = vmul.f32 %v550, 1.442695
  %v553 = vpow.pop %v552
  %v554 = vmul.f32 %v551, 1.442695
  %v555 = vpow.pop %v554
  %v556 = vadd.f32 %v553, 1.0
  %v557 = vadd.f32 %v555, 1.0
  %v558 = vrcp.pop %v556
  %v559 = vmul.f32 1.0, %v558
  %v560 = vrcp.pop %v557
  %v561 = vmul.f32 1.0, %v560
  %v562 = vmul.f32 %v548, %v559
  %v563 = vmul.f32 %v549, %v561
  %s564 = scalar_lea.vmem %s3, 2
  %v565 = vld [vmem:[%s564] sm:$0x3]
  %v566 = vpack.c.bf16 %v562, %v562
  %v567 = vpack.c.bf16 %v563, %v563
  %v569 = vsel %vm255, %v565, 0
  %v572 = vsel %vm259, %v566, 0
  %574 = vmatprep.subr.bf16.mxu0 0
  %575 = vmatpush1.bf16.msra.mxu0 0
  %576 = vmatprep.subr.bf16.mxu0 0
  %577 = vmatpush1.bf16.msra.mxu0 0
  %578 = vmatprep.subr.bf16.mxu0 0
  %579 = vmatpush1.bf16.msra.mxu0 0
  %580 = vmatprep.subr.bf16.mxu0 0
  %581 = vmatpush1.bf16.msra.mxu0 0
  %582 = vmatprep.subr.bf16.mxu0 0
  %583 = vmatpush1.bf16.msra.mxu0 0
  %584 = vmatprep.subr.bf16.mxu0 0
  %585 = vmatpush1.bf16.msra.mxu0 0
  %586 = vmatprep.subr.bf16.mxu0 0
  %587 = vmatpush1.bf16.msra.mxu0 0
  %588 = vmatprep.subr.bf16.mxu0 0
  %589 = vmatpush1.bf16.msra.mxu0 %v572
  %590 = vmatprep.subr.bf16.mxu0 0
  %591 = vmatpush2.bf16.msra.mxu0 0
  %592 = vmatprep.subr.bf16.mxu0 0
  %593 = vmatpush2.bf16.msra.mxu0 0
  %594 = vmatprep.subr.bf16.mxu0 0
  %595 = vmatpush2.bf16.msra.mxu0 0
  %596 = vmatprep.subr.bf16.mxu0 0
  %597 = vmatpush2.bf16.msra.mxu0 0
  %598 = vmatprep.subr.bf16.mxu0 0
  %599 = vmatpush2.bf16.msra.mxu0 0
  %600 = vmatprep.subr.bf16.mxu0 0
  %601 = vmatpush2.bf16.msra.mxu0 0
  %602 = vmatprep.subr.bf16.mxu0 0
  %603 = vmatpush2.bf16.msra.mxu0 0
  %604 = vmatprep.subr.bf16.mxu0 0
  %605 = vmatpush2.bf16.msra.mxu0 0
  %606 = vmatprep.mubr.bf16.mxu0 0
  %607 = vmatmul.mubr.bf16.gmra.mxu0 %v569
  %v608 = vpop.f32.mrf.mxu0
  %v609 = vadd.f32 0.0, %v608
  %v610 = vpop.f32.mrf.mxu0
  %v611 = vpop.f32.mrf.mxu0
  %v612 = vpop.f32.mrf.mxu0
  %613 = vdwg.mxu0
  %v615 = vsel %vm259, %v567, 0
  %617 = vmatprep.subr.bf16.mxu0 0
  %618 = vmatpush1.bf16.msra.mxu0 0
  %619 = vmatprep.subr.bf16.mxu0 0
  %620 = vmatpush1.bf16.msra.mxu0 0
  %621 = vmatprep.subr.bf16.mxu0 0
  %622 = vmatpush1.bf16.msra.mxu0 0
  %623 = vmatprep.subr.bf16.mxu0 0
  %624 = vmatpush1.bf16.msra.mxu0 0
  %625 = vmatprep.subr.bf16.mxu0 0
  %626 = vmatpush1.bf16.msra.mxu0 0
  %627 = vmatprep.subr.bf16.mxu0 0
  %628 = vmatpush1.bf16.msra.mxu0 0
  %629 = vmatprep.subr.bf16.mxu0 0
  %630 = vmatpush1.bf16.msra.mxu0 0
  %631 = vmatprep.subr.bf16.mxu0 0
  %632 = vmatpush1.bf16.msra.mxu0 %v615
  %633 = vmatprep.subr.bf16.mxu0 0
  %634 = vmatpush2.bf16.msra.mxu0 0
  %635 = vmatprep.subr.bf16.mxu0 0
  %636 = vmatpush2.bf16.msra.mxu0 0
  %637 = vmatprep.subr.bf16.mxu0 0
  %638 = vmatpush2.bf16.msra.mxu0 0
  %639 = vmatprep.subr.bf16.mxu0 0
  %640 = vmatpush2.bf16.msra.mxu0 0
  %641 = vmatprep.subr.bf16.mxu0 0
  %642 = vmatpush2.bf16.msra.mxu0 0
  %643 = vmatprep.subr.bf16.mxu0 0
  %644 = vmatpush2.bf16.msra.mxu0 0
  %645 = vmatprep.subr.bf16.mxu0 0
  %646 = vmatpush2.bf16.msra.mxu0 0
  %647 = vmatprep.subr.bf16.mxu0 0
  %648 = vmatpush2.bf16.msra.mxu0 0
  %649 = vmatprep.mubr.bf16.mxu0 0
  %650 = vmatmul.mubr.bf16.gmra.mxu0 %v569
  %v651 = vpop.f32.mrf.mxu0
  %v652 = vadd.f32 0.0, %v651
  %v653 = vpop.f32.mrf.mxu0
  %v654 = vpop.f32.mrf.mxu0
  %v655 = vpop.f32.mrf.mxu0
  %656 = vdwg.mxu0
  %v657 = vadd.f32 %v354, %v609
  %v658 = vadd.f32 %v355, %v652
  %s659 = scalar_lea.vmem %s4, 4
  %v660 = vld [vmem:[%s659] sm:$0xf]
  %662 = vset.pattern.permute.xlu0 0
  %663 = vperm.xlu0 %662, %v660
  %v664 = vpop.permute.xlu0 %663
  %v666 = vadd.f32 %v657, %v664
  %v667 = vadd.f32 %v658, %v664
  %v668 = vld [vmem:[%s5] sm:$0x3]
  %v669 = vpack.c.bf16 %v666, %v666
  %v670 = vpack.c.bf16 %v667, %v667
  %v672 = vsel %vm56, %v668, 0
  %v675 = vsel %vm63, %v669, 0
  %677 = vmatprep.subr.bf16.mxu0 0
  %678 = vmatpush1.bf16.msra.mxu0 0
  %679 = vmatprep.subr.bf16.mxu0 0
  %680 = vmatpush1.bf16.msra.mxu0 0
  %681 = vmatprep.subr.bf16.mxu0 0
  %682 = vmatpush1.bf16.msra.mxu0 0
  %683 = vmatprep.subr.bf16.mxu0 0
  %684 = vmatpush1.bf16.msra.mxu0 0
  %685 = vmatprep.subr.bf16.mxu0 0
  %686 = vmatpush1.bf16.msra.mxu0 0
  %687 = vmatprep.subr.bf16.mxu0 0
  %688 = vmatpush1.bf16.msra.mxu0 0
  %689 = vmatprep.subr.bf16.mxu0 0
  %690 = vmatpush1.bf16.msra.mxu0 0
  %691 = vmatprep.subr.bf16.mxu0 0
  %692 = vmatpush1.bf16.msra.mxu0 %v675
  %693 = vmatprep.subr.bf16.mxu0 0
  %694 = vmatpush2.bf16.msra.mxu0 0
  %695 = vmatprep.subr.bf16.mxu0 0
  %696 = vmatpush2.bf16.msra.mxu0 0
  %697 = vmatprep.subr.bf16.mxu0 0
  %698 = vmatpush2.bf16.msra.mxu0 0
  %699 = vmatprep.subr.bf16.mxu0 0
  %700 = vmatpush2.bf16.msra.mxu0 0
  %701 = vmatprep.subr.bf16.mxu0 0
  %702 = vmatpush2.bf16.msra.mxu0 0
  %703 = vmatprep.subr.bf16.mxu0 0
  %704 = vmatpush2.bf16.msra.mxu0 0
  %705 = vmatprep.subr.bf16.mxu0 0
  %706 = vmatpush2.bf16.msra.mxu0 0
  %707 = vmatprep.subr.bf16.mxu0 0
  %708 = vmatpush2.bf16.msra.mxu0 0
  %709 = vmatprep.mubr.bf16.mxu0 0
  %710 = vmatmul.mubr.bf16.gmra.mxu0 %v672
  %v711 = vpop.f32.mrf.mxu0
  %v712 = vadd.f32 0.0, %v711
  %v713 = vpop.f32.mrf.mxu0
  %v714 = vpop.f32.mrf.mxu0
  %v715 = vpop.f32.mrf.mxu0
  %716 = vdwg.mxu0
  %v718 = vsel %vm63, %v670, 0
  %720 = vmatprep.subr.bf16.mxu0 0
  %721 = vmatpush1.bf16.msra.mxu0 0
  %722 = vmatprep.subr.bf16.mxu0 0
  %723 = vmatpush1.bf16.msra.mxu0 0
  %724 = vmatprep.subr.bf16.mxu0 0
  %725 = vmatpush1.bf16.msra.mxu0 0
  %726 = vmatprep.subr.bf16.mxu0 0
  %727 = vmatpush1.bf16.msra.mxu0 0
  %728 = vmatprep.subr.bf16.mxu0 0
  %729 = vmatpush1.bf16.msra.mxu0 0
  %730 = vmatprep.subr.bf16.mxu0 0
  %731 = vmatpush1.bf16.msra.mxu0 0
  %732 = vmatprep.subr.bf16.mxu0 0
  %733 = vmatpush1.bf16.msra.mxu0 0
  %734 = vmatprep.subr.bf16.mxu0 0
  %735 = vmatpush1.bf16.msra.mxu0 %v718
  %736 = vmatprep.subr.bf16.mxu0 0
  %737 = vmatpush2.bf16.msra.mxu0 0
  %738 = vmatprep.subr.bf16.mxu0 0
  %739 = vmatpush2.bf16.msra.mxu0 0
  %740 = vmatprep.subr.bf16.mxu0 0
  %741 = vmatpush2.bf16.msra.mxu0 0
  %742 = vmatprep.subr.bf16.mxu0 0
  %743 = vmatpush2.bf16.msra.mxu0 0
  %744 = vmatprep.subr.bf16.mxu0 0
  %745 = vmatpush2.bf16.msra.mxu0 0
  %746 = vmatprep.subr.bf16.mxu0 0
  %747 = vmatpush2.bf16.msra.mxu0 0
  %748 = vmatprep.subr.bf16.mxu0 0
  %749 = vmatpush2.bf16.msra.mxu0 0
  %750 = vmatprep.subr.bf16.mxu0 0
  %751 = vmatpush2.bf16.msra.mxu0 0
  %752 = vmatprep.mubr.bf16.mxu0 0
  %753 = vmatmul.mubr.bf16.gmra.mxu0 %v672
  %v754 = vpop.f32.mrf.mxu0
  %v755 = vadd.f32 0.0, %v754
  %v756 = vpop.f32.mrf.mxu0
  %v757 = vpop.f32.mrf.mxu0
  %v758 = vpop.f32.mrf.mxu0
  %759 = vdwg.mxu0
  %760 = vrot.lane.b32.xlu0 %v712, 16
  %v761 = vpop.permute.xlu0 %760
  %v762 = vsel %vm168, %v761, %v712
  %763 = vrot.lane.b32.xlu0 %v755, 16
  %v764 = vpop.permute.xlu0 %763
  %v765 = vsel %vm168, %v764, %v755
  %766 = vrot.lane.b32.xlu0 %v762, 16
  %v767 = vpop.permute.xlu0 %766
  %768 = vrot.lane.b32.xlu0 %v765, 16
  %v769 = vpop.permute.xlu0 %768
  %v770 = vsel %vm168, %v767, %v712
  %v771 = vsel %vm168, %v769, %v755
  %774 = vrot.lane.b32.xlu0 %v770, 113
  %v775 = vpop.permute.xlu0 %774
  %776 = vrot.lane.b32.xlu0 %v771, 113
  %v777 = vpop.permute.xlu0 %776
  %v780 = vsel %vm195, %v775, 0.0
  %v781 = vsel %vm195, %v777, 0.0
  %v782 = vld [vmem:[%s6] sm:$0x3]
  %v784 = vsel %vm56, %v782, 0
  %786 = vmatprep.subr.bf16.mxu0 0
  %787 = vmatpush1.bf16.msra.mxu0 0
  %788 = vmatprep.subr.bf16.mxu0 0
  %789 = vmatpush1.bf16.msra.mxu0 0
  %790 = vmatprep.subr.bf16.mxu0 0
  %791 = vmatpush1.bf16.msra.mxu0 0
  %792 = vmatprep.subr.bf16.mxu0 0
  %793 = vmatpush1.bf16.msra.mxu0 0
  %794 = vmatprep.subr.bf16.mxu0 0
  %795 = vmatpush1.bf16.msra.mxu0 0
  %796 = vmatprep.subr.bf16.mxu0 0
  %797 = vmatpush1.bf16.msra.mxu0 0
  %798 = vmatprep.subr.bf16.mxu0 0
  %799 = vmatpush1.bf16.msra.mxu0 0
  %800 = vmatprep.subr.bf16.mxu0 0
  %801 = vmatpush1.bf16.msra.mxu0 %v675
  %802 = vmatprep.subr.bf16.mxu0 0
  %803 = vmatpush2.bf16.msra.mxu0 0
  %804 = vmatprep.subr.bf16.mxu0 0
  %805 = vmatpush2.bf16.msra.mxu0 0
  %806 = vmatprep.subr.bf16.mxu0 0
  %807 = vmatpush2.bf16.msra.mxu0 0
  %808 = vmatprep.subr.bf16.mxu0 0
  %809 = vmatpush2.bf16.msra.mxu0 0
  %810 = vmatprep.subr.bf16.mxu0 0
  %811 = vmatpush2.bf16.msra.mxu0 0
  %812 = vmatprep.subr.bf16.mxu0 0
  %813 = vmatpush2.bf16.msra.mxu0 0
  %814 = vmatprep.subr.bf16.mxu0 0
  %815 = vmatpush2.bf16.msra.mxu0 0
  %816 = vmatprep.subr.bf16.mxu0 0
  %817 = vmatpush2.bf16.msra.mxu0 0
  %818 = vmatprep.mubr.bf16.mxu0 0
  %819 = vmatmul.mubr.bf16.gmra.mxu0 %v784
  %v820 = vpop.f32.mrf.mxu0
  %v821 = vadd.f32 0.0, %v820
  %v822 = vpop.f32.mrf.mxu0
  %v823 = vpop.f32.mrf.mxu0
  %v824 = vpop.f32.mrf.mxu0
  %825 = vdwg.mxu0
  %826 = vmatprep.subr.bf16.mxu0 0
  %827 = vmatpush1.bf16.msra.mxu0 0
  %828 = vmatprep.subr.bf16.mxu0 0
  %829 = vmatpush1.bf16.msra.mxu0 0
  %830 = vmatprep.subr.bf16.mxu0 0
  %831 = vmatpush1.bf16.msra.mxu0 0
  %832 = vmatprep.subr.bf16.mxu0 0
  %833 = vmatpush1.bf16.msra.mxu0 0
  %834 = vmatprep.subr.bf16.mxu0 0
  %835 = vmatpush1.bf16.msra.mxu0 0
  %836 = vmatprep.subr.bf16.mxu0 0
  %837 = vmatpush1.bf16.msra.mxu0 0
  %838 = vmatprep.subr.bf16.mxu0 0
  %839 = vmatpush1.bf16.msra.mxu0 0
  %840 = vmatprep.subr.bf16.mxu0 0
  %841 = vmatpush1.bf16.msra.mxu0 %v718
  %842 = vmatprep.subr.bf16.mxu0 0
  %843 = vmatpush2.bf16.msra.mxu0 0
  %844 = vmatprep.subr.bf16.mxu0 0
  %845 = vmatpush2.bf16.msra.mxu0 0
  %846 = vmatprep.subr.bf16.mxu0 0
  %847 = vmatpush2.bf16.msra.mxu0 0
  %848 = vmatprep.subr.bf16.mxu0 0
  %849 = vmatpush2.bf16.msra.mxu0 0
  %850 = vmatprep.subr.bf16.mxu0 0
  %851 = vmatpush2.bf16.msra.mxu0 0
  %852 = vmatprep.subr.bf16.mxu0 0
  %853 = vmatpush2.bf16.msra.mxu0 0
  %854 = vmatprep.subr.bf16.mxu0 0
  %855 = vmatpush2.bf16.msra.mxu0 0
  %856 = vmatprep.subr.bf16.mxu0 0
  %857 = vmatpush2.bf16.msra.mxu0 0
  %858 = vmatprep.mubr.bf16.mxu0 0
  %859 = vmatmul.mubr.bf16.gmra.mxu0 %v784
  %v860 = vpop.f32.mrf.mxu0
  %v861 = vadd.f32 0.0, %v860
  %v862 = vpop.f32.mrf.mxu0
  %v863 = vpop.f32.mrf.mxu0
  %v864 = vpop.f32.mrf.mxu0
  %865 = vdwg.mxu0
  %v866 = vadd.f32 %v780, %v821
  %v867 = vadd.f32 %v781, %v861
  %v868 = vld [vmem:[%s7] sm:$0xf]
  %870 = vset.pattern.permute.xlu0 0
  %871 = vperm.xlu0 %870, %v868
  %v872 = vpop.permute.xlu0 %871
  %v874 = vadd.f32 %v866, %v872
  %v875 = vadd.f32 %v867, %v872
  %vm876 = vcmask 125952
  %877 = vst.msk [vmem:[%s10] sm:$0xf] %vm876, %v874
  %878 = vst.msk [vmem:[%s10 + $0x4] sm:$0xf] %vm876, %v875
  %v879 = vld [vmem:[%s8] sm:$0xf]
  %v880 = vld [vmem:[%s9] sm:$0xff]
  %882 = vrot.lane.b32.xlu0 %v669, 113
  %v883 = vpop.permute.xlu0 %882
  %v885 = vsel %vm56, %v879, 0
  %v888 = vsel %vm63, %v883, 0
  %890 = vmatprep.subr.bf16.mxu0 0
  %891 = vmatpush1.bf16.msra.mxu0 0
  %892 = vmatprep.subr.bf16.mxu0 0
  %893 = vmatpush1.bf16.msra.mxu0 0
  %894 = vmatprep.subr.bf16.mxu0 0
  %895 = vmatpush1.bf16.msra.mxu0 0
  %896 = vmatprep.subr.bf16.mxu0 0
  %897 = vmatpush1.bf16.msra.mxu0 0
  %898 = vmatprep.subr.bf16.mxu0 0
  %899 = vmatpush1.bf16.msra.mxu0 0
  %900 = vmatprep.subr.bf16.mxu0 0
  %901 = vmatpush1.bf16.msra.mxu0 0
  %902 = vmatprep.subr.bf16.mxu0 0
  %903 = vmatpush1.bf16.msra.mxu0 0
  %904 = vmatprep.subr.bf16.mxu0 0
  %905 = vmatpush1.bf16.msra.mxu0 %v888
  %906 = vmatprep.subr.bf16.mxu0 0
  %907 = vmatpush2.bf16.msra.mxu0 0
  %908 = vmatprep.subr.bf16.mxu0 0
  %909 = vmatpush2.bf16.msra.mxu0 0
  %910 = vmatprep.subr.bf16.mxu0 0
  %911 = vmatpush2.bf16.msra.mxu0 0
  %912 = vmatprep.subr.bf16.mxu0 0
  %913 = vmatpush2.bf16.msra.mxu0 0
  %914 = vmatprep.subr.bf16.mxu0 0
  %915 = vmatpush2.bf16.msra.mxu0 0
  %916 = vmatprep.subr.bf16.mxu0 0
  %917 = vmatpush2.bf16.msra.mxu0 0
  %918 = vmatprep.subr.bf16.mxu0 0
  %919 = vmatpush2.bf16.msra.mxu0 0
  %920 = vmatprep.subr.bf16.mxu0 0
  %921 = vmatpush2.bf16.msra.mxu0 0
  %922 = vmatprep.mubr.bf16.mxu0 0
  %923 = vmatmul.mubr.bf16.gmra.mxu0 %v885
  %v924 = vpop.f32.mrf.mxu0
  %v925 = vadd.f32 %v880, %v924
  %v926 = vpop.f32.mrf.mxu0
  %v927 = vpop.f32.mrf.mxu0
  %v928 = vpop.f32.mrf.mxu0
  %929 = vdwg.mxu0
  %931 = vrot.lane.b32.xlu0 %v670, 113
  %v932 = vpop.permute.xlu0 %931
  %v934 = vsel %vm63, %v932, 0
  %936 = vmatprep.subr.bf16.mxu0 0
  %937 = vmatpush1.bf16.msra.mxu0 0
  %938 = vmatprep.subr.bf16.mxu0 0
  %939 = vmatpush1.bf16.msra.mxu0 0
  %940 = vmatprep.subr.bf16.mxu0 0
  %941 = vmatpush1.bf16.msra.mxu0 0
  %942 = vmatprep.subr.bf16.mxu0 0
  %943 = vmatpush1.bf16.msra.mxu0 0
  %944 = vmatprep.subr.bf16.mxu0 0
  %945 = vmatpush1.bf16.msra.mxu0 0
  %946 = vmatprep.subr.bf16.mxu0 0
  %947 = vmatpush1.bf16.msra.mxu0 0
  %948 = vmatprep.subr.bf16.mxu0 0
  %949 = vmatpush1.bf16.msra.mxu0 0
  %950 = vmatprep.subr.bf16.mxu0 0
  %951 = vmatpush1.bf16.msra.mxu0 %v934
  %952 = vmatprep.subr.bf16.mxu0 0
  %953 = vmatpush2.bf16.msra.mxu0 0
  %954 = vmatprep.subr.bf16.mxu0 0
  %955 = vmatpush2.bf16.msra.mxu0 0
  %956 = vmatprep.subr.bf16.mxu0 0
  %957 = vmatpush2.bf16.msra.mxu0 0
  %958 = vmatprep.subr.bf16.mxu0 0
  %959 = vmatpush2.bf16.msra.mxu0 0
  %960 = vmatprep.subr.bf16.mxu0 0
  %961 = vmatpush2.bf16.msra.mxu0 0
  %962 = vmatprep.subr.bf16.mxu0 0
  %963 = vmatpush2.bf16.msra.mxu0 0
  %964 = vmatprep.subr.bf16.mxu0 0
  %965 = vmatpush2.bf16.msra.mxu0 0
  %966 = vmatprep.subr.bf16.mxu0 0
  %967 = vmatpush2.bf16.msra.mxu0 0
  %968 = vmatprep.mubr.bf16.mxu0 0
  %969 = vmatmul.mubr.bf16.gmra.mxu0 %v885
  %v970 = vpop.f32.mrf.mxu0
  %v971 = vadd.f32 %v880, %v970
  %v972 = vpop.f32.mrf.mxu0
  %v973 = vpop.f32.mrf.mxu0
  %v974 = vpop.f32.mrf.mxu0
  %975 = vdwg.mxu0
  %vm976 = vcmask 7168
  %977 = vst.msk [vmem:[%s11] sm:$0xff] %vm976, %v925
  %978 = vst.msk [vmem:[%s11 + $0x8] sm:$0xff] %vm976, %v971
  // Predicated region
  $region42: #{blocks_forward.1} parent=0 // pred_check
    _
  $region43: #{blocks_forward.1} parent=0 // pred_check_branch
    %980 = sbr.rel (0) target = $region45
  $region44: #{blocks_forward.1} parent=0 // pred_region
    _
  $region45: #{blocks_forward.1} parent=0 // pred_fallthru
    _
  // Predicated region
  $region46: #{blocks_forward.1} parent=0 // pred_check
    _
  $region47: #{blocks_forward.1} parent=0 // pred_check_branch
    %982 = sbr.rel (0) target = $region49
  $region48: #{blocks_forward.1} parent=0 // pred_region
    _
  $region49: #{blocks_forward.1} parent=0 // pred_fallthru
    _
  // Predicated region
  $region50: #{blocks_forward.1} parent=0 // pred_check
    _
  $region51: #{blocks_forward.1} parent=0 // pred_check_branch
    %984 = sbr.rel (0) target = $region53
  $region52: #{blocks_forward.1} parent=0 // pred_region
    _
  $region53: #{blocks_forward.1} parent=0 // pred_fallthru
    _
  // Predicated region
  $region54: #{blocks_forward.1} parent=0 // pred_check
    _
  $region55: #{blocks_forward.1} parent=0 // pred_check_branch
    %986 = sbr.rel (0) target = $region57
  $region56: #{blocks_forward.1} parent=0 // pred_region
    _
  $region57: #{blocks_forward.1} parent=0 // pred_fallthru
    _

</llo_original>
